<compile_context>
chip_gen: v6e
topology: v6e:2x2x1
jax: 0.10.0
libtpu: 0.0.40
codegen_flags: <defaults>
</compile_context>

<pallas_src>
import jax
import jax.numpy as jnp
from jax.experimental import pallas as pl
from jax.experimental.pallas import tpu as pltpu

_TARGET_BLOCK_BYTES = 4 << 20      # ~4 MiB per (double-buffered) buffer per step
_SPLIT_MIN_BYTES = 1 << 20         # above this, force >= 2 grid steps (v7x: 2 TCs)
_SINGLE_BLOCK_MAX_ELEMS = 1 << 16  # ragged sizes up to this run as one (1, n) block


def _cdiv(a, b):
    return -(-a // b)


def _round_up(a, b):
    return _cdiv(a, b) * b


def _swish_kernel(x_ref, o_ref):
    x = x_ref[...]
    o_ref[...] = x * jax.nn.sigmoid(x)


def _swish_affine_kernel(beta_ref, x_ref, o_ref):
    x = x_ref[...]
    xb = x * beta_ref[0].astype(x.dtype)   # scalar beta read from SMEM
    o_ref[...] = xb * jax.nn.sigmoid(xb)


def _swish_2d(x2d, beta):
    """Run the Swish kernel over a 2-D lane-dense view (rows, lanes)."""
    rows, lanes = x2d.shape
    itemsize = x2d.dtype.itemsize
    sub = max(8, 32 // itemsize)           # sublane packing: f32->8, bf16->16, 8-bit->32
    row_bytes = lanes * itemsize

    target_rows = max(sub, (_TARGET_BLOCK_BYTES // row_bytes) // sub * sub)
    split_rows = max(sub, _SPLIT_MIN_BYTES // row_bytes)

    if rows <= split_rows:
        block_rows = rows                  # single block == full array dims (always legal)
    elif rows <= target_rows:
        # Mid-sized: split into >= 2 blocks so both v7x TensorCores get work.
        block_rows = _round_up(_cdiv(rows, 2), sub)
    else:
        block_rows = target_rows
    grid_rows = _cdiv(rows, block_rows)    # trailing partial block is masked by Pallas

    vspec = pl.BlockSpec((block_rows, lanes), lambda i: (i, 0))
    if beta is None:
        kernel = _swish_kernel
        in_specs = [vspec]
        args = (x2d,)
    else:
        kernel = _swish_affine_kernel
        beta_arr = jnp.asarray(beta, dtype=jnp.float32).reshape(1)
        in_specs = [pl.BlockSpec(memory_space=pltpu.MemorySpace.SMEM), vspec]
        args = (beta_arr, x2d)

    return pl.pallas_call(
        kernel,
        out_shape=jax.ShapeDtypeStruct((rows, lanes), x2d.dtype),
        grid=(grid_rows,),
        in_specs=in_specs,
        out_specs=vspec,
        compiler_params=pltpu.CompilerParams(
            dimension_semantics=("parallel",),
            vmem_limit_bytes=32 << 20),
    )(*args)


def swish(x, beta=None):
    """Swish forward pass. `beta=None` <=> affine=False in the PyTorch module."""
    orig_shape = x.shape
    n = x.size
    if n == 0:
        return x

    # Fast path: pick the widest lane count that divides n exactly -> the 2-D
    # view is a free reshape (no pad, no slice, no extra HBM passes).
    lanes = None
    for cand in (1024, 512, 256, 128):
        if n % cand == 0:
            lanes = cand
            break

    if lanes is not None:
        out2d = _swish_2d(x.reshape(n // lanes, lanes), beta)
        return out2d.reshape(orig_shape)

    if n <= _SINGLE_BLOCK_MAX_ELEMS:
        # Small size not divisible by 128: a single full-array (1, n) block is
        # legal (block == full dims) and still copy-free.
        out2d = _swish_2d(x.reshape(1, n), beta)
        return out2d.reshape(orig_shape)

    # Large size not divisible by 128 (essentially never happens for CNN
    # activations): pad the flat view to the next 1024 multiple and slice the
    # result back.  This costs extra HBM passes, so it is kept only as a
    # correctness fallback.
    lanes = 1024
    rows = _cdiv(n, lanes)
    flat = jnp.pad(x.reshape(-1), (0, rows * lanes - n))
    out2d = _swish_2d(flat.reshape(rows, lanes), beta)
    return out2d.reshape(-1)[:n].reshape(orig_shape)


def reference_swish(x, beta=None):
    """Pure-JAX reference reproducing the PyTorch Swish.forward semantics."""
    if beta is not None:
        x = x * jnp.asarray(beta, dtype=x.dtype)
    return x * jax.nn.sigmoid(x)


def _check(actual, expected, rtol=1e-5, atol=1e-5):
    a = jnp.asarray(actual, jnp.float32)
    e = jnp.asarray(expected, jnp.float32)
    assert a.shape == e.shape, (a.shape, e.shape)
    err = float(jnp.max(jnp.abs(a - e)))
    assert jnp.allclose(a, e, rtol=rtol, atol=atol), err


if __name__ == "__main__":
    key = jax.random.PRNGKey(0)
    k1, k2, k3, k4, k5 = jax.random.split(key, 5)

    # Small shape consistent with the module: batch=2, channels=4, spatial=16.
    x = jax.random.normal(k1, (2, 4, 16, 16), dtype=jnp.float32)

    # affine=False (default): single full-array block, zero-copy reshape path.
    y = jax.block_until_ready(swish(x))
    _check(y, reference_swish(x))

    # affine=True with a non-trivial learnable beta (torch init is 1.0).
    beta = jnp.array([0.75], dtype=jnp.float32)
    ya = jax.block_until_ready(swish(x, beta=beta))
    _check(ya, reference_swish(x, beta=beta))

    # Mid-sized input: splits into 2 parallel blocks (both TCs on v7x).
    xb = jax.random.normal(k2, (4, 64, 64, 64), dtype=jnp.float32)
    yb = jax.block_until_ready(swish(xb, beta=beta))
    _check(yb, reference_swish(xb, beta=beta))

    # Rows not a multiple of the block -> Pallas masks the trailing partial block.
    xc = jax.random.normal(k3, (300, 32, 32), dtype=jnp.float32)
    yc = jax.block_until_ready(swish(xc))
    _check(yc, reference_swish(xc))

    # Small ragged size (not a multiple of 128): single (1, n) block, no padding.
    xd = jax.random.normal(k4, (3, 5, 7), dtype=jnp.float32)
    yd = jax.block_until_ready(swish(xd))
    _check(yd, reference_swish(xd))

    # Large ragged size: exercises the pad/slice correctness fallback.
    xe = jax.random.normal(k5, (1000, 100), dtype=jnp.float32)
    ye = jax.block_until_ready(swish(xe, beta=beta))
    _check(ye, reference_swish(xe, beta=beta))

    # bf16 input: halves HBM bytes; sublane packing handled via block sizing.
    xf = x.astype(jnp.bfloat16)
    yf = jax.block_until_ready(swish(xf, beta=beta))
    _check(yf, reference_swish(xf, beta=beta), rtol=1e-2, atol=1e-2)

    print("KERNEL_OK")
</pallas_src>

<mosaic_0001>
module attributes {stable_mosaic.version = 11 : i64} {
  func.func @_swish_kernel(%arg0: i32, %arg1: memref<2x1024xf32, #tpu.memory_space<vmem>>, %arg2: memref<2x1024xf32, #tpu.memory_space<vmem>>) attributes {dimension_semantics = [#tpu.dimension_semantics<parallel>], iteration_bounds = array<i64: 1>, scalar_prefetch = 0 : i64, scratch_operands = 0 : i64, tpu.core_type = #tpu.core_type<tc>, window_params = [{transform_indices = @transform_0, window_bounds = array<i64: 2, 1024>}, {transform_indices = @transform_1, window_bounds = array<i64: 2, 1024>}]} {
    %c0 = arith.constant 0 : index
    %c0_0 = arith.constant 0 : index
    %0 = vector.load %arg1[%c0, %c0_0] : memref<2x1024xf32, #tpu.memory_space<vmem>>, vector<2x1024xf32>
    %1 = arith.negf %0 : vector<2x1024xf32>
    %2 = math.exp %1 : vector<2x1024xf32>
    %cst = arith.constant 1.000000e+00 : f32
    %3 = vector.broadcast %cst : f32 to vector<2x1024xf32>
    %4 = arith.addf %3, %2 : vector<2x1024xf32>
    %5 = arith.divf %3, %4 : vector<2x1024xf32>
    %6 = arith.mulf %0, %5 : vector<2x1024xf32>
    %c0_1 = arith.constant 0 : index
    %c0_2 = arith.constant 0 : index
    %7 = vector.load %arg2[%c0_1, %c0_2] : memref<2x1024xf32, #tpu.memory_space<vmem>>, vector<2x1024xf32>
    tpu.vector_store %arg2[%c0_1, %c0_2], %6 {strides = array<i32>} : memref<2x1024xf32, #tpu.memory_space<vmem>>, vector<2x1024xf32>,
    return
  }
  func.func @transform_0(%arg0: i32) -> (i32, i32) {
    %c0_i32 = arith.constant 0 : i32
    %c0_i32_0 = arith.constant 0 : i32
    return %arg0, %c0_i32 : i32, i32
  }
  func.func @transform_1(%arg0: i32) -> (i32, i32) {
    %c0_i32 = arith.constant 0 : i32
    %c0_i32_0 = arith.constant 0 : i32
    return %arg0, %c0_i32 : i32, i32
  }
}

</mosaic_0001>

<llo_original>
// kernel: tpu_custom_call.1
$region0: #{tpu_custom_call.1}
  #allocation0 [shape = 'u32[]', space=smem, size = 0x4, offset = 0x4, fixed_abs, tag = 'smem constant byte address 0x4 - core index']
  #allocation1 [shape = 'u32[144,128]{1,0:T(1,128)}', space=vmem, size = 0x12000, scoped, tag = 'internal scratch']
  %s0 = inlined_call_operand.hbm [shape: f32[2,1024], index: 0, kind: input, shape index: {}]
  %s1 = inlined_call_operand.hbm [shape: f32[2,1024], index: 1, kind: output, shape index: {}]
  %s2 = sld [smem:[#allocation0]]
  $region18: #{tpu_custom_call.1} parent=0
    _
  %s4 = ssub.s32 1, %s2
  %s5 = scalar_select 0, %s4, %s2
  $region1: #{tpu_custom_call.1} parent=0
    #allocation2 [shape = 'u8[8192]{0}', space=vmem, size = 0x2000, scoped, tag = 'input window, operand 0, single buffered']
    #allocation3 [shape = 's32[1]{0}', space=sflag, size = 0x4, scoped, tag = 'scoped memory for tpu_custom_call.1']
    #allocation4 [shape = 's32[1]{0}', space=sflag, size = 0x4, scoped, tag = 'scoped memory for tpu_custom_call.1']
    #allocation5 [shape = 'u8[8192]{0}', space=vmem, size = 0x2000, scoped, tag = 'output window, operand 0, single buffered']
    %6 = vsyncpa [#allocation3], 0
    %7 = vsyncpa [#allocation4], 0
    // Predicated region
    $region2: #{tpu_custom_call.1} parent=1 // pred_check
      _
    $region3: #{tpu_custom_call.1} parent=1 // pred_check_branch
      %9 = sbr.rel (0) target = $region5
    $region4: #{tpu_custom_call.1} parent=1 // pred_region
      %s11 = ssub.s32 256, 256
      %12 = vsyncadd [#allocation3], %s11
      %s14 = sshll.u32 [#allocation2], 4
      %s15 = int_to_ptr.vmem [resolvable:$true] %s14
      %17 = dma.hbm_to_vmem [thread:$0]  %s0, 256, %s15, [#allocation3]
    $region5: #{tpu_custom_call.1} parent=1 // pred_fallthru
      _
    // Predicated region
    $region6: #{tpu_custom_call.1} parent=1 // pred_check
      _
    $region7: #{tpu_custom_call.1} parent=1 // pred_check_branch
      %19 = sbr.rel (0) target = $region9
    $region8: #{tpu_custom_call.1} parent=1 // pred_region
      %20 = dma.done [#allocation3], 256
    $region9: #{tpu_custom_call.1} parent=1 // pred_fallthru
      _
    %v21 = vld [vmem:[#allocation2] sm:$0xff]
    %v22 = vld [vmem:[#allocation2 + $0x8] sm:$0xff]
    %v23 = vxor.u32 %v21, 2147483648
    %v24 = vxor.u32 %v22, 2147483648
    %v25 = vmul.f32 %v23, 1.442695
    %v26 = vpow.pop %v25
    %v27 = vmul.f32 %v24, 1.442695
    %v28 = vpow.pop %v27
    %v29 = vadd.f32 %v26, 1.0
    %v30 = vadd.f32 %v28, 1.0
    %v31 = vrcp.pop %v29
    %v32 = vmul.f32 1.0, %v31
    %v33 = vrcp.pop %v30
    %v34 = vmul.f32 1.0, %v33
    %v35 = vmul.f32 %v21, %v32
    %v36 = vmul.f32 %v22, %v34
    %37 = vst [vmem:[#allocation5] sm:$0xff] %v35
    %38 = vst [vmem:[#allocation5 + $0x8] sm:$0xff] %v36
    // Predicated region
    $region10: #{tpu_custom_call.1} parent=1 // pred_check
      _
    $region11: #{tpu_custom_call.1} parent=1 // pred_check_branch
      %40 = sbr.rel (0) target = $region13
    $region12: #{tpu_custom_call.1} parent=1 // pred_region
      %s42 = ssub.s32 256, 256
      %43 = vsyncadd [#allocation4], %s42
      %s45 = sshll.u32 [#allocation5], 4
      %s46 = int_to_ptr.vmem [resolvable:$true] %s45
      %48 = dma.vmem_to_hbm [thread:$0]  %s46, 256, %s1, [#allocation4]
    $region13: #{tpu_custom_call.1} parent=1 // pred_fallthru
      _
    // Predicated region
    $region14: #{tpu_custom_call.1} parent=1 // pred_check
      _
    $region15: #{tpu_custom_call.1} parent=1 // pred_check_branch
      %50 = sbr.rel (0) target = $region17
    $region16: #{tpu_custom_call.1} parent=1 // pred_region
      %51 = dma.done [#allocation4], 256
    $region17: #{tpu_custom_call.1} parent=1 // pred_fallthru
      _
    %52 = vsyncpa [#allocation3], 1
    %53 = vsyncpa [#allocation4], 1

</llo_original>
